<compile_context>
chip_gen: v7x
topology: tpu7x:2x2x1
jax: 0.10.0
libtpu: 0.0.40
codegen_flags: <defaults>
</compile_context>

<pallas_src>
import jax
import jax.numpy as jnp
from jax.experimental import pallas as pl
from jax.experimental.pallas import tpu as pltpu

INPUT_SIZE = 1
HIDDEN = 32


def rnn_kernel(x_ref, h0_ref, w_ih_ref, b_ref, w_hh_t_ref, w_out_ref,
               b_out_ref, y_ref, h_last_ref):
    # x_ref:      (B, T)  input sequence (INPUT_SIZE=1, squeezed), batch-major
    # h0_ref:     (B, H)  initial hidden state
    # w_ih_ref:   (1, H)  W_ih^T as a row (I=1)
    # b_ref:      (1, H)  fused bias b_ih + b_hh
    # w_hh_t_ref: (H, H)  W_hh^T
    # w_out_ref:  (1, H)  output-projection row (Linear(32,1) weight)
    # b_out_ref:  (1, 1)  output-projection bias
    # y_ref:      (B, T)  per-timestep outputs (lane-dense 2-D block)
    # h_last_ref: (B, H)  final hidden state
    T = x_ref.shape[1]

    x = x_ref[...]                    # (B, T)
    w_ih = w_ih_ref[...]              # (1, H)
    bias = b_ref[...]                 # (1, H)
    w_hh_t = w_hh_t_ref[...]          # (H, H)  hoisted loop-invariant load
    w_out = w_out_ref[...]            # (1, H)
    b_out = b_out_ref[...]            # (1, 1)

    # Fused input projection for ALL timesteps up front: independent of the
    # hidden state, so it is pure VPU work off the serial dependency chain.
    pre = x[:, :, None] * w_ih[:, None, :] + bias[:, None, :]   # (B, T, H)

    # Serial recurrence; T=8 is static -> fully unrolled, h stays in vregs.
    # f32 operands + f32 accumulation keep the 1e-4 tolerance over 8 steps.
    h = h0_ref[...]                   # (B, H)
    hs = []
    for t in range(T):
        h = jnp.tanh(pre[:, t, :] +
                     jnp.dot(h, w_hh_t, preferred_element_type=jnp.float32))
        hs.append(h)

    # Fused output projection (off the serial chain): stack the trajectory as
    # (B, T, H) so the lane reduction lands directly in the (B, T) output
    # block (T on lanes -> no width-1 masked stores, no wrapper transpose).
    h_all = jnp.stack(hs, axis=1)                               # (B, T, H)
    y_ref[...] = jnp.sum(h_all * w_out[:, None, :], axis=-1) + b_out
    h_last_ref[...] = h


def my_rnn_forward(x, h_state, params):
    """x: (B, T, 1) float32, h_state: (1, B, H) float32 (or None).

    Returns (outs, h_state) matching the PyTorch module:
      outs: (B, T, 1), h_state: (1, B, H).
    """
    B, T, _ = x.shape
    H = params["w_hh"].shape[0]
    if h_state is None:
        h_state = jnp.zeros((1, B, H), jnp.float32)

    x_bt = x[..., 0].astype(jnp.float32)                          # (B, T)
    h0 = h_state[0].astype(jnp.float32)                           # (B, H)
    w_ih_row = params["w_ih"].reshape(1, H).astype(jnp.float32)   # (1, H)
    bias = (params["b_ih"] + params["b_hh"]).reshape(1, H).astype(jnp.float32)
    w_hh_t = params["w_hh"].T.astype(jnp.float32)                 # (H, H)
    w_out_row = params["w_out"].reshape(1, H).astype(jnp.float32) # (1, H)
    b_out = params["b_out"].reshape(1, 1).astype(jnp.float32)     # (1, 1)

    vmem = pl.BlockSpec(memory_space=pltpu.MemorySpace.VMEM)
    y_bt, h_last = pl.pallas_call(
        rnn_kernel,
        out_shape=(jax.ShapeDtypeStruct((B, T), jnp.float32),
                   jax.ShapeDtypeStruct((B, H), jnp.float32)),
        in_specs=[vmem] * 7,
        out_specs=(vmem, vmem),
    )(x_bt, h0, w_ih_row, bias, w_hh_t, w_out_row, b_out)

    y = y_bt[..., None]               # (B, T, 1)  metadata-only reshape
    return y, h_last[None]            # (1, B, H)


if __name__ == "__main__":
    B, T, H = 2, 8, HIDDEN
    key = jax.random.PRNGKey(0)
    kx, k1, k2, k3, k4, k5, k6 = jax.random.split(key, 7)

    # Deterministic PyTorch-style uniform(-1/sqrt(H), 1/sqrt(H)) init.
    bound = 1.0 / jnp.sqrt(jnp.float32(H))
    params = {
        "w_ih": jax.random.uniform(k1, (H, INPUT_SIZE), jnp.float32, -bound, bound),
        "w_hh": jax.random.uniform(k2, (H, H), jnp.float32, -bound, bound),
        "b_ih": jax.random.uniform(k3, (H,), jnp.float32, -bound, bound),
        "b_hh": jax.random.uniform(k4, (H,), jnp.float32, -bound, bound),
        "w_out": jax.random.uniform(k5, (1, H), jnp.float32, -bound, bound),
        "b_out": jax.random.uniform(k6, (1,), jnp.float32, -bound, bound),
    }

    x = jax.random.normal(kx, (B, T, INPUT_SIZE), jnp.float32)
    h_state = jnp.zeros((1, B, H), jnp.float32)   # equivalent to h_state=None

    y, h_out = jax.jit(my_rnn_forward)(x, h_state, params)
    jax.block_until_ready((y, h_out))

    # Pure-JAX reference mirroring the PyTorch forward.
    def ref(x, h_state, p):
        h = h_state[0]
        ys = []
        for t in range(x.shape[1]):
            h = jnp.tanh(x[:, t, :] @ p["w_ih"].T + p["b_ih"]
                         + h @ p["w_hh"].T + p["b_hh"])
            ys.append(h @ p["w_out"].T + p["b_out"])
        return jnp.stack(ys, axis=1), h[None]

    y_ref, h_ref = ref(x, h_state, params)
    assert y.shape == (B, T, 1) and h_out.shape == (1, B, H)
    assert jnp.allclose(y, y_ref, atol=1e-4, rtol=1e-4)
    assert jnp.allclose(h_out, h_ref, atol=1e-4, rtol=1e-4)
    print("KERNEL_OK")
</pallas_src>

<mosaic_0001>
module attributes {stable_mosaic.version = 11 : i64} {
  func.func @rnn_kernel(%arg0: memref<2x8xf32, #tpu.memory_space<vmem>>, %arg1: memref<2x32xf32, #tpu.memory_space<vmem>>, %arg2: memref<1x32xf32, #tpu.memory_space<vmem>>, %arg3: memref<1x32xf32, #tpu.memory_space<vmem>>, %arg4: memref<32x32xf32, #tpu.memory_space<vmem>>, %arg5: memref<1x32xf32, #tpu.memory_space<vmem>>, %arg6: memref<1x1xf32, #tpu.memory_space<vmem>>, %arg7: memref<2x8xf32, #tpu.memory_space<vmem>>, %arg8: memref<2x32xf32, #tpu.memory_space<vmem>>) attributes {dimension_semantics = [], scalar_prefetch = 0 : i64, scratch_operands = 0 : i64, tpu.core_type = #tpu.core_type<tc>} {
    %c0 = arith.constant 0 : index
    %c0_0 = arith.constant 0 : index
    %0 = vector.load %arg0[%c0, %c0_0] : memref<2x8xf32, #tpu.memory_space<vmem>>, vector<2x8xf32>
    %c0_1 = arith.constant 0 : index
    %c0_2 = arith.constant 0 : index
    %1 = vector.load %arg2[%c0_1, %c0_2] : memref<1x32xf32, #tpu.memory_space<vmem>>, vector<1x32xf32>
    %c0_3 = arith.constant 0 : index
    %c0_4 = arith.constant 0 : index
    %2 = vector.load %arg3[%c0_3, %c0_4] : memref<1x32xf32, #tpu.memory_space<vmem>>, vector<1x32xf32>
    %c0_5 = arith.constant 0 : index
    %c0_6 = arith.constant 0 : index
    %3 = vector.load %arg4[%c0_5, %c0_6] : memref<32x32xf32, #tpu.memory_space<vmem>>, vector<32x32xf32>
    %c0_7 = arith.constant 0 : index
    %c0_8 = arith.constant 0 : index
    %4 = vector.load %arg5[%c0_7, %c0_8] : memref<1x32xf32, #tpu.memory_space<vmem>>, vector<1x32xf32>
    %c0_9 = arith.constant 0 : index
    %c0_10 = arith.constant 0 : index
    %5 = vector.load %arg6[%c0_9, %c0_10] : memref<1x1xf32, #tpu.memory_space<vmem>>, vector<1x1xf32>
    %6 = vector.shape_cast %0 : vector<2x8xf32> to vector<2x8x1xf32>
    %7 = vector.shape_cast %1 : vector<1x32xf32> to vector<1x1x32xf32>
    %8 = vector.broadcast %6 : vector<2x8x1xf32> to vector<2x8x32xf32>
    %9 = vector.broadcast %7 : vector<1x1x32xf32> to vector<2x8x32xf32>
    %10 = arith.mulf %8, %9 : vector<2x8x32xf32>
    %11 = vector.shape_cast %2 : vector<1x32xf32> to vector<1x1x32xf32>
    %12 = vector.broadcast %11 : vector<1x1x32xf32> to vector<2x8x32xf32>
    %13 = arith.addf %10, %12 : vector<2x8x32xf32>
    %c0_11 = arith.constant 0 : index
    %c0_12 = arith.constant 0 : index
    %14 = vector.load %arg1[%c0_11, %c0_12] : memref<2x32xf32, #tpu.memory_space<vmem>>, vector<2x32xf32>
    %15 = vector.extract_strided_slice %13 {offsets = [0, 0, 0], sizes = [2, 1, 32], strides = [1, 1, 1]} : vector<2x8x32xf32> to vector<2x1x32xf32>
    %16 = vector.shape_cast %15 : vector<2x1x32xf32> to vector<2x32xf32>
    %cst = arith.constant dense<0.000000e+00> : vector<2x32xf32>
    %17 = tpu.matmul %14, %3, %cst {dimension_numbers = #tpu.dot_dimension_numbers<[1], [0], [0], [1], [0, 0, 1, 1], [], []>} : vector<2x32xf32>, vector<32x32xf32>, vector<2x32xf32> -> vector<2x32xf32>
    %18 = arith.addf %16, %17 : vector<2x32xf32>
    %19 = math.tanh %18 : vector<2x32xf32>
    %20 = vector.extract_strided_slice %13 {offsets = [0, 1, 0], sizes = [2, 1, 32], strides = [1, 1, 1]} : vector<2x8x32xf32> to vector<2x1x32xf32>
    %21 = vector.shape_cast %20 : vector<2x1x32xf32> to vector<2x32xf32>
    %cst_13 = arith.constant dense<0.000000e+00> : vector<2x32xf32>
    %22 = tpu.matmul %19, %3, %cst_13 {dimension_numbers = #tpu.dot_dimension_numbers<[1], [0], [0], [1], [0, 0, 1, 1], [], []>} : vector<2x32xf32>, vector<32x32xf32>, vector<2x32xf32> -> vector<2x32xf32>
    %23 = arith.addf %21, %22 : vector<2x32xf32>
    %24 = math.tanh %23 : vector<2x32xf32>
    %25 = vector.extract_strided_slice %13 {offsets = [0, 2, 0], sizes = [2, 1, 32], strides = [1, 1, 1]} : vector<2x8x32xf32> to vector<2x1x32xf32>
    %26 = vector.shape_cast %25 : vector<2x1x32xf32> to vector<2x32xf32>
    %cst_14 = arith.constant dense<0.000000e+00> : vector<2x32xf32>
    %27 = tpu.matmul %24, %3, %cst_14 {dimension_numbers = #tpu.dot_dimension_numbers<[1], [0], [0], [1], [0, 0, 1, 1], [], []>} : vector<2x32xf32>, vector<32x32xf32>, vector<2x32xf32> -> vector<2x32xf32>
    %28 = arith.addf %26, %27 : vector<2x32xf32>
    %29 = math.tanh %28 : vector<2x32xf32>
    %30 = vector.extract_strided_slice %13 {offsets = [0, 3, 0], sizes = [2, 1, 32], strides = [1, 1, 1]} : vector<2x8x32xf32> to vector<2x1x32xf32>
    %31 = vector.shape_cast %30 : vector<2x1x32xf32> to vector<2x32xf32>
    %cst_15 = arith.constant dense<0.000000e+00> : vector<2x32xf32>
    %32 = tpu.matmul %29, %3, %cst_15 {dimension_numbers = #tpu.dot_dimension_numbers<[1], [0], [0], [1], [0, 0, 1, 1], [], []>} : vector<2x32xf32>, vector<32x32xf32>, vector<2x32xf32> -> vector<2x32xf32>
    %33 = arith.addf %31, %32 : vector<2x32xf32>
    %34 = math.tanh %33 : vector<2x32xf32>
    %35 = vector.extract_strided_slice %13 {offsets = [0, 4, 0], sizes = [2, 1, 32], strides = [1, 1, 1]} : vector<2x8x32xf32> to vector<2x1x32xf32>
    %36 = vector.shape_cast %35 : vector<2x1x32xf32> to vector<2x32xf32>
    %cst_16 = arith.constant dense<0.000000e+00> : vector<2x32xf32>
    %37 = tpu.matmul %34, %3, %cst_16 {dimension_numbers = #tpu.dot_dimension_numbers<[1], [0], [0], [1], [0, 0, 1, 1], [], []>} : vector<2x32xf32>, vector<32x32xf32>, vector<2x32xf32> -> vector<2x32xf32>
    %38 = arith.addf %36, %37 : vector<2x32xf32>
    %39 = math.tanh %38 : vector<2x32xf32>
    %40 = vector.extract_strided_slice %13 {offsets = [0, 5, 0], sizes = [2, 1, 32], strides = [1, 1, 1]} : vector<2x8x32xf32> to vector<2x1x32xf32>
    %41 = vector.shape_cast %40 : vector<2x1x32xf32> to vector<2x32xf32>
    %cst_17 = arith.constant dense<0.000000e+00> : vector<2x32xf32>
    %42 = tpu.matmul %39, %3, %cst_17 {dimension_numbers = #tpu.dot_dimension_numbers<[1], [0], [0], [1], [0, 0, 1, 1], [], []>} : vector<2x32xf32>, vector<32x32xf32>, vector<2x32xf32> -> vector<2x32xf32>
    %43 = arith.addf %41, %42 : vector<2x32xf32>
    %44 = math.tanh %43 : vector<2x32xf32>
    %45 = vector.extract_strided_slice %13 {offsets = [0, 6, 0], sizes = [2, 1, 32], strides = [1, 1, 1]} : vector<2x8x32xf32> to vector<2x1x32xf32>
    %46 = vector.shape_cast %45 : vector<2x1x32xf32> to vector<2x32xf32>
    %cst_18 = arith.constant dense<0.000000e+00> : vector<2x32xf32>
    %47 = tpu.matmul %44, %3, %cst_18 {dimension_numbers = #tpu.dot_dimension_numbers<[1], [0], [0], [1], [0, 0, 1, 1], [], []>} : vector<2x32xf32>, vector<32x32xf32>, vector<2x32xf32> -> vector<2x32xf32>
    %48 = arith.addf %46, %47 : vector<2x32xf32>
    %49 = math.tanh %48 : vector<2x32xf32>
    %50 = vector.extract_strided_slice %13 {offsets = [0, 7, 0], sizes = [2, 1, 32], strides = [1, 1, 1]} : vector<2x8x32xf32> to vector<2x1x32xf32>
    %51 = vector.shape_cast %50 : vector<2x1x32xf32> to vector<2x32xf32>
    %cst_19 = arith.constant dense<0.000000e+00> : vector<2x32xf32>
    %52 = tpu.matmul %49, %3, %cst_19 {dimension_numbers = #tpu.dot_dimension_numbers<[1], [0], [0], [1], [0, 0, 1, 1], [], []>} : vector<2x32xf32>, vector<32x32xf32>, vector<2x32xf32> -> vector<2x32xf32>
    %53 = arith.addf %51, %52 : vector<2x32xf32>
    %54 = math.tanh %53 : vector<2x32xf32>
    %55 = vector.shape_cast %19 : vector<2x32xf32> to vector<2x1x32xf32>
    %56 = vector.shape_cast %24 : vector<2x32xf32> to vector<2x1x32xf32>
    %57 = vector.shape_cast %29 : vector<2x32xf32> to vector<2x1x32xf32>
    %58 = vector.shape_cast %34 : vector<2x32xf32> to vector<2x1x32xf32>
    %59 = vector.shape_cast %39 : vector<2x32xf32> to vector<2x1x32xf32>
    %60 = vector.shape_cast %44 : vector<2x32xf32> to vector<2x1x32xf32>
    %61 = vector.shape_cast %49 : vector<2x32xf32> to vector<2x1x32xf32>
    %62 = vector.shape_cast %54 : vector<2x32xf32> to vector<2x1x32xf32>
    %63 = tpu.concatenate %55, %56, %57, %58, %59, %60, %61, %62 in 1 : vector<2x1x32xf32>, vector<2x1x32xf32>, vector<2x1x32xf32>, vector<2x1x32xf32>, vector<2x1x32xf32>, vector<2x1x32xf32>, vector<2x1x32xf32>, vector<2x1x32xf32> -> vector<2x8x32xf32>
    %64 = vector.shape_cast %4 : vector<1x32xf32> to vector<1x1x32xf32>
    %65 = vector.broadcast %64 : vector<1x1x32xf32> to vector<2x8x32xf32>
    %66 = arith.mulf %63, %65 : vector<2x8x32xf32>
    %cst_20 = arith.constant dense<0.000000e+00> : vector<2x8xf32>
    %67 = vector.multi_reduction <add>, %66, %cst_20 [2] : vector<2x8x32xf32> to vector<2x8xf32>
    %68 = vector.broadcast %5 : vector<1x1xf32> to vector<2x8xf32>
    %69 = arith.addf %67, %68 : vector<2x8xf32>
    %c0_21 = arith.constant 0 : index
    %c0_22 = arith.constant 0 : index
    %70 = vector.load %arg7[%c0_21, %c0_22] : memref<2x8xf32, #tpu.memory_space<vmem>>, vector<2x8xf32>
    tpu.vector_store %arg7[%c0_21, %c0_22], %69 {strides = array<i32>} : memref<2x8xf32, #tpu.memory_space<vmem>>, vector<2x8xf32>,
    %c0_23 = arith.constant 0 : index
    %c0_24 = arith.constant 0 : index
    %71 = vector.load %arg8[%c0_23, %c0_24] : memref<2x32xf32, #tpu.memory_space<vmem>>, vector<2x32xf32>
    tpu.vector_store %arg8[%c0_23, %c0_24], %54 {strides = array<i32>} : memref<2x32xf32, #tpu.memory_space<vmem>>, vector<2x32xf32>,
    return
  }
}

</mosaic_0001>

<llo_original>
// kernel: my_rnn_forward.1
$region0: #{my_rnn_forward.1}
  #allocation0 [shape = 'u32[]', space=smem, size = 0x4, offset = 0x4, fixed_abs, tag = 'smem constant byte address 0x4 - core index']
  #allocation1 [shape = 'u32[144,128]{1,0:T(1,128)}', space=vmem, size = 0x12000, scoped, tag = 'internal scratch']
  #allocation2 [shape = 'f32[1,1]{1,0:T(1,128)S(1)}', space=vmem, size = 0x200, scoped, tag = 'scoped memory for my_rnn_forward.1']
  %s0 = inlined_call_operand.vmem [shape: f32[2,8], index: 0, kind: input, shape index: {}]
  %s1 = inlined_call_operand.vmem [shape: f32[2,32], index: 1, kind: input, shape index: {}]
  %s2 = inlined_call_operand.vmem [shape: f32[1,32], index: 2, kind: input, shape index: {}]
  %s3 = inlined_call_operand.vmem [shape: f32[1,32], index: 3, kind: input, shape index: {}]
  %s4 = inlined_call_operand.vmem [shape: f32[32,32], index: 4, kind: input, shape index: {}]
  %s5 = inlined_call_operand.vmem [shape: f32[1,32], index: 5, kind: input, shape index: {}]
  %s6 = inlined_call_operand.<no memory space> [shape: f32[1,1], index: 6, kind: input, shape index: {}]
  %s7 = inlined_call_operand.hbm [shape: f32[2,8], index: 7, kind: output, shape index: {0}]
  %s8 = inlined_call_operand.hbm [shape: f32[2,32], index: 8, kind: output, shape index: {1}]
  %9 = xla_tuple %s7, %s8
  %s10 = sld [smem:[#allocation0]]
  $region46: #{my_rnn_forward.1} parent=0
    _
  %s12 = ssub.s32 1, %s10
  %s13 = scalar_select 0, %s12, %s10
  %v14 = vstv %s6
  %15 = vst [vmem:[#allocation2] sm:$0x1] %v14
  $region1: #{my_rnn_forward.1} parent=0
    #allocation3 [shape = 'u8[1024]{0}', space=vmem, size = 0x400, scoped, tag = 'output window, operand 0, single buffered']
    #allocation4 [shape = 's32[1]{0}', space=sflag, size = 0x4, scoped, tag = 'scoped memory for my_rnn_forward.1']
    #allocation5 [shape = 'u8[1024]{0}', space=vmem, size = 0x400, scoped, tag = 'output window, operand 1, single buffered']
    #allocation6 [shape = 's32[1]{0}', space=sflag, size = 0x4, scoped, tag = 'scoped memory for my_rnn_forward.1']
    %16 = vsyncpa [#allocation4], 0
    %17 = vsyncpa [#allocation6], 0
    // Predicated region
    $region2: #{my_rnn_forward.1} parent=1 // pred_check
      _
    $region3: #{my_rnn_forward.1} parent=1 // pred_check_branch
      %19 = sbr.rel (0) target = $region5
    $region4: #{my_rnn_forward.1} parent=1 // pred_region
      _
    $region5: #{my_rnn_forward.1} parent=1 // pred_fallthru
      _
    // Predicated region
    $region6: #{my_rnn_forward.1} parent=1 // pred_check
      _
    $region7: #{my_rnn_forward.1} parent=1 // pred_check_branch
      %21 = sbr.rel (0) target = $region9
    $region8: #{my_rnn_forward.1} parent=1 // pred_region
      _
    $region9: #{my_rnn_forward.1} parent=1 // pred_fallthru
      _
    // Predicated region
    $region10: #{my_rnn_forward.1} parent=1 // pred_check
      _
    $region11: #{my_rnn_forward.1} parent=1 // pred_check_branch
      %23 = sbr.rel (0) target = $region13
    $region12: #{my_rnn_forward.1} parent=1 // pred_region
      _
    $region13: #{my_rnn_forward.1} parent=1 // pred_fallthru
      _
    // Predicated region
    $region14: #{my_rnn_forward.1} parent=1 // pred_check
      _
    $region15: #{my_rnn_forward.1} parent=1 // pred_check_branch
      %25 = sbr.rel (0) target = $region17
    $region16: #{my_rnn_forward.1} parent=1 // pred_region
      _
    $region17: #{my_rnn_forward.1} parent=1 // pred_fallthru
      _
    // Predicated region
    $region18: #{my_rnn_forward.1} parent=1 // pred_check
      _
    $region19: #{my_rnn_forward.1} parent=1 // pred_check_branch
      %27 = sbr.rel (0) target = $region21
    $region20: #{my_rnn_forward.1} parent=1 // pred_region
      _
    $region21: #{my_rnn_forward.1} parent=1 // pred_fallthru
      _
    // Predicated region
    $region22: #{my_rnn_forward.1} parent=1 // pred_check
      _
    $region23: #{my_rnn_forward.1} parent=1 // pred_check_branch
      %29 = sbr.rel (0) target = $region25
    $region24: #{my_rnn_forward.1} parent=1 // pred_region
      _
    $region25: #{my_rnn_forward.1} parent=1 // pred_fallthru
      _
    // Predicated region
    $region26: #{my_rnn_forward.1} parent=1 // pred_check
      _
    $region27: #{my_rnn_forward.1} parent=1 // pred_check_branch
      %31 = sbr.rel (0) target = $region29
    $region28: #{my_rnn_forward.1} parent=1 // pred_region
      _
    $region29: #{my_rnn_forward.1} parent=1 // pred_fallthru
      _
    %v32 = vld [vmem:[%s0] sm:$0x3]
    %v33 = vld [vmem:[%s2] sm:$0x1]
    %v34 = vld [vmem:[%s3] sm:$0x1]
    %v35 = vld [vmem:[%s4] sm:$0xff]
    %v36 = vld [vmem:[%s4 + $0x8] sm:$0xff]
    %v37 = vld [vmem:[%s4 + $0x10] sm:$0xff]
    %v38 = vld [vmem:[%s4 + $0x18] sm:$0xff]
    %v39 = vld [vmem:[%s5] sm:$0x1]
    %v40 = vld [vmem:[#allocation2] sm:$0x1]
    %v41 = vlaneseq
    %v42 = vshrl.u32 %v41, 7
    %v43 = vsub.s32 0, %v42
    %v44 = vrot.slane %v32, %v43
    %46 = vbcast.lane.b32.xlu0 %v44, 256
    %v47 = vpop.permute.xlu0 %46
    %v48 = vlaneseq
    %v49 = vshrl.u32 %v48, 7
    %v50 = vsub.s32 1, %v49
    %v51 = vrot.slane %v32, %v50
    %53 = vbcast.lane.b32.xlu0 %v51, 256
    %v54 = vpop.permute.xlu0 %53
    %v56 = vlaneseq
    %v57 = vshrl.u32 %v56, 7
    %v58 = vsub.s32 0, %v57
    %v59 = vrot.slane %v33, %v58
    %v61 = vmul.f32 %v47, %v59
    %v62 = vmul.f32 %v54, %v59
    %v64 = vlaneseq
    %v65 = vshrl.u32 %v64, 7
    %v66 = vsub.s32 0, %v65
    %v67 = vrot.slane %v34, %v66
    %v69 = vadd.f32 %v61, %v67
    %v70 = vadd.f32 %v62, %v67
    %v71 = vld [vmem:[%s1] sm:$0x3]
    %vm72 = vcmask 261120
    %v74 = vsel %vm72, %v71, 0
    %76 = vmatprep.subr.mxu0 0.0
    %77 = vmatpush1.msra.mxu0 %v35
    %78 = vmatprep.subr.mxu0 0.0
    %79 = vmatpush1.msra.mxu0 %v36
    %80 = vmatprep.subr.mxu0 0.0
    %81 = vmatpush1.msra.mxu0 %v37
    %82 = vmatprep.subr.mxu0 0.0
    %83 = vmatpush1.msra.mxu0 %v38
    %84 = vmatprep.subr.mxu0 0.0
    %85 = vmatpush1.msra.mxu0 0.0
    %86 = vmatprep.subr.mxu0 0.0
    %87 = vmatpush1.msra.mxu0 0.0
    %88 = vmatprep.subr.mxu0 0.0
    %89 = vmatpush1.msra.mxu0 0.0
    %90 = vmatprep.subr.mxu0 0.0
    %91 = vmatpush1.msra.mxu0 0.0
    %92 = vmatprep.subr.mxu0 0.0
    %93 = vmatpush1.msra.mxu0 0.0
    %94 = vmatprep.subr.mxu0 0.0
    %95 = vmatpush1.msra.mxu0 0.0
    %96 = vmatprep.subr.mxu0 0.0
    %97 = vmatpush1.msra.mxu0 0.0
    %98 = vmatprep.subr.mxu0 0.0
    %99 = vmatpush1.msra.mxu0 0.0
    %100 = vmatprep.subr.mxu0 0.0
    %101 = vmatpush1.msra.mxu0 0.0
    %102 = vmatprep.subr.mxu0 0.0
    %103 = vmatpush1.msra.mxu0 0.0
    %104 = vmatprep.subr.mxu0 0.0
    %105 = vmatpush1.msra.mxu0 0.0
    %106 = vmatprep.subr.mxu0 0.0
    %107 = vmatpush1.msra.mxu0 0.0
    %108 = vmatprep.subr.mxu0 0.0
    %109 = vmatpush1.msra.mxu0 0.0
    %110 = vmatprep.subr.mxu0 0.0
    %111 = vmatpush1.msra.mxu0 0.0
    %112 = vmatprep.subr.mxu0 0.0
    %113 = vmatpush1.msra.mxu0 0.0
    %114 = vmatprep.subr.mxu0 0.0
    %115 = vmatpush1.msra.mxu0 0.0
    %116 = vmatprep.subr.mxu0 0.0
    %117 = vmatpush1.msra.mxu0 0.0
    %118 = vmatprep.subr.mxu0 0.0
    %119 = vmatpush1.msra.mxu0 0.0
    %120 = vmatprep.subr.mxu0 0.0
    %121 = vmatpush1.msra.mxu0 0.0
    %122 = vmatprep.subr.mxu0 0.0
    %123 = vmatpush1.msra.mxu0 0.0
    %124 = vmatprep.subr.mxu0 0.0
    %125 = vmatpush1.msra.mxu0 0.0
    %126 = vmatprep.subr.mxu0 0.0
    %127 = vmatpush1.msra.mxu0 0.0
    %128 = vmatprep.subr.mxu0 0.0
    %129 = vmatpush1.msra.mxu0 0.0
    %130 = vmatprep.subr.mxu0 0.0
    %131 = vmatpush1.msra.mxu0 0.0
    %132 = vmatprep.subr.mxu0 0.0
    %133 = vmatpush1.msra.mxu0 0.0
    %134 = vmatprep.subr.mxu0 0.0
    %135 = vmatpush1.msra.mxu0 0.0
    %136 = vmatprep.subr.mxu0 0.0
    %137 = vmatpush1.msra.mxu0 0.0
    %138 = vmatprep.subr.mxu0 0.0
    %139 = vmatpush1.msra.mxu0 0.0
    %140 = vmatprep.mubr.f32.mxu0 0.0
    %141 = vmatmul.mubr.f32.gmra.mrb[0].mxu0 %v74
    %v142 = vpop.f32.mrb[0].mxu0
    %v143 = vadd.f32 0.0, %v142
    %v144 = vpop.f32.mrb[0].mxu0
    %145 = vdwg.mxu0
    %v147 = vrot.slane %v143, 1
    %v150 = vadd.f32 %v69, %v143
    %v151 = vadd.f32 %v70, %v147
    %v152 = vtanh.pop %v150
    %v153 = vtanh.pop %v151
    %v156 = vrot.slane %v153, 7
    %vm157 = vcmask 1041409
    %v158 = vsel %vm157, %v156, %v152
    %v159 = vsel %vm72, %v158, 0
    %161 = vmatprep.subr.mxu0 0.0
    %162 = vmatpush1.msra.mxu0 %v35
    %163 = vmatprep.subr.mxu0 0.0
    %164 = vmatpush1.msra.mxu0 %v36
    %165 = vmatprep.subr.mxu0 0.0
    %166 = vmatpush1.msra.mxu0 %v37
    %167 = vmatprep.subr.mxu0 0.0
    %168 = vmatpush1.msra.mxu0 %v38
    %169 = vmatprep.subr.mxu0 0.0
    %170 = vmatpush1.msra.mxu0 0.0
    %171 = vmatprep.subr.mxu0 0.0
    %172 = vmatpush1.msra.mxu0 0.0
    %173 = vmatprep.subr.mxu0 0.0
    %174 = vmatpush1.msra.mxu0 0.0
    %175 = vmatprep.subr.mxu0 0.0
    %176 = vmatpush1.msra.mxu0 0.0
    %177 = vmatprep.subr.mxu0 0.0
    %178 = vmatpush1.msra.mxu0 0.0
    %179 = vmatprep.subr.mxu0 0.0
    %180 = vmatpush1.msra.mxu0 0.0
    %181 = vmatprep.subr.mxu0 0.0
    %182 = vmatpush1.msra.mxu0 0.0
    %183 = vmatprep.subr.mxu0 0.0
    %184 = vmatpush1.msra.mxu0 0.0
    %185 = vmatprep.subr.mxu0 0.0
    %186 = vmatpush1.msra.mxu0 0.0
    %187 = vmatprep.subr.mxu0 0.0
    %188 = vmatpush1.msra.mxu0 0.0
    %189 = vmatprep.subr.mxu0 0.0
    %190 = vmatpush1.msra.mxu0 0.0
    %191 = vmatprep.subr.mxu0 0.0
    %192 = vmatpush1.msra.mxu0 0.0
    %193 = vmatprep.subr.mxu0 0.0
    %194 = vmatpush1.msra.mxu0 0.0
    %195 = vmatprep.subr.mxu0 0.0
    %196 = vmatpush1.msra.mxu0 0.0
    %197 = vmatprep.subr.mxu0 0.0
    %198 = vmatpush1.msra.mxu0 0.0
    %199 = vmatprep.subr.mxu0 0.0
    %200 = vmatpush1.msra.mxu0 0.0
    %201 = vmatprep.subr.mxu0 0.0
    %202 = vmatpush1.msra.mxu0 0.0
    %203 = vmatprep.subr.mxu0 0.0
    %204 = vmatpush1.msra.mxu0 0.0
    %205 = vmatprep.subr.mxu0 0.0
    %206 = vmatpush1.msra.mxu0 0.0
    %207 = vmatprep.subr.mxu0 0.0
    %208 = vmatpush1.msra.mxu0 0.0
    %209 = vmatprep.subr.mxu0 0.0
    %210 = vmatpush1.msra.mxu0 0.0
    %211 = vmatprep.subr.mxu0 0.0
    %212 = vmatpush1.msra.mxu0 0.0
    %213 = vmatprep.subr.mxu0 0.0
    %214 = vmatpush1.msra.mxu0 0.0
    %215 = vmatprep.subr.mxu0 0.0
    %216 = vmatpush1.msra.mxu0 0.0
    %217 = vmatprep.subr.mxu0 0.0
    %218 = vmatpush1.msra.mxu0 0.0
    %219 = vmatprep.subr.mxu0 0.0
    %220 = vmatpush1.msra.mxu0 0.0
    %221 = vmatprep.subr.mxu0 0.0
    %222 = vmatpush1.msra.mxu0 0.0
    %223 = vmatprep.subr.mxu0 0.0
    %224 = vmatpush1.msra.mxu0 0.0
    %225 = vmatprep.mubr.f32.mxu0 0.0
    %226 = vmatmul.mubr.f32.gmra.mrb[0].mxu0 %v159
    %v227 = vpop.f32.mrb[0].mxu0
    %v228 = vadd.f32 0.0, %v227
    %v229 = vpop.f32.mrb[0].mxu0
    %230 = vdwg.mxu0
    %v232 = vrot.slane %v228, 7
    %v235 = vadd.f32 %v69, %v232
    %v236 = vadd.f32 %v70, %v228
    %v237 = vtanh.pop %v235
    %v238 = vtanh.pop %v236
    %v241 = vrot.slane %v237, 1
    %v242 = vsel %vm157, %v238, %v241
    %v243 = vsel %vm72, %v242, 0
    %245 = vmatprep.subr.mxu0 0.0
    %246 = vmatpush1.msra.mxu0 %v35
    %247 = vmatprep.subr.mxu0 0.0
    %248 = vmatpush1.msra.mxu0 %v36
    %249 = vmatprep.subr.mxu0 0.0
    %250 = vmatpush1.msra.mxu0 %v37
    %251 = vmatprep.subr.mxu0 0.0
    %252 = vmatpush1.msra.mxu0 %v38
    %253 = vmatprep.subr.mxu0 0.0
    %254 = vmatpush1.msra.mxu0 0.0
    %255 = vmatprep.subr.mxu0 0.0
    %256 = vmatpush1.msra.mxu0 0.0
    %257 = vmatprep.subr.mxu0 0.0
    %258 = vmatpush1.msra.mxu0 0.0
    %259 = vmatprep.subr.mxu0 0.0
    %260 = vmatpush1.msra.mxu0 0.0
    %261 = vmatprep.subr.mxu0 0.0
    %262 = vmatpush1.msra.mxu0 0.0
    %263 = vmatprep.subr.mxu0 0.0
    %264 = vmatpush1.msra.mxu0 0.0
    %265 = vmatprep.subr.mxu0 0.0
    %266 = vmatpush1.msra.mxu0 0.0
    %267 = vmatprep.subr.mxu0 0.0
    %268 = vmatpush1.msra.mxu0 0.0
    %269 = vmatprep.subr.mxu0 0.0
    %270 = vmatpush1.msra.mxu0 0.0
    %271 = vmatprep.subr.mxu0 0.0
    %272 = vmatpush1.msra.mxu0 0.0
    %273 = vmatprep.subr.mxu0 0.0
    %274 = vmatpush1.msra.mxu0 0.0
    %275 = vmatprep.subr.mxu0 0.0
    %276 = vmatpush1.msra.mxu0 0.0
    %277 = vmatprep.subr.mxu0 0.0
    %278 = vmatpush1.msra.mxu0 0.0
    %279 = vmatprep.subr.mxu0 0.0
    %280 = vmatpush1.msra.mxu0 0.0
    %281 = vmatprep.subr.mxu0 0.0
    %282 = vmatpush1.msra.mxu0 0.0
    %283 = vmatprep.subr.mxu0 0.0
    %284 = vmatpush1.msra.mxu0 0.0
    %285 = vmatprep.subr.mxu0 0.0
    %286 = vmatpush1.msra.mxu0 0.0
    %287 = vmatprep.subr.mxu0 0.0
    %288 = vmatpush1.msra.mxu0 0.0
    %289 = vmatprep.subr.mxu0 0.0
    %290 = vmatpush1.msra.mxu0 0.0
    %291 = vmatprep.subr.mxu0 0.0
    %292 = vmatpush1.msra.mxu0 0.0
    %293 = vmatprep.subr.mxu0 0.0
    %294 = vmatpush1.msra.mxu0 0.0
    %295 = vmatprep.subr.mxu0 0.0
    %296 = vmatpush1.msra.mxu0 0.0
    %297 = vmatprep.subr.mxu0 0.0
    %298 = vmatpush1.msra.mxu0 0.0
    %299 = vmatprep.subr.mxu0 0.0
    %300 = vmatpush1.msra.mxu0 0.0
    %301 = vmatprep.subr.mxu0 0.0
    %302 = vmatpush1.msra.mxu0 0.0
    %303 = vmatprep.subr.mxu0 0.0
    %304 = vmatpush1.msra.mxu0 0.0
    %305 = vmatprep.subr.mxu0 0.0
    %306 = vmatpush1.msra.mxu0 0.0
    %307 = vmatprep.subr.mxu0 0.0
    %308 = vmatpush1.msra.mxu0 0.0
    %309 = vmatprep.mubr.f32.mxu0 0.0
    %310 = vmatmul.mubr.f32.gmra.mrb[0].mxu0 %v243
    %v311 = vpop.f32.mrb[0].mxu0
    %v312 = vadd.f32 0.0, %v311
    %v313 = vpop.f32.mrb[0].mxu0
    %314 = vdwg.mxu0
    %v316 = vrot.slane %v312, 6
    %v317 = vrot.slane %v312, 7
    %v320 = vadd.f32 %v69, %v316
    %v321 = vadd.f32 %v70, %v317
    %v322 = vtanh.pop %v320
    %v323 = vtanh.pop %v321
    %v326 = vrot.slane %v322, 2
    %v327 = vrot.slane %v323, 1
    %v328 = vsel %vm157, %v327, %v326
    %v329 = vsel %vm72, %v328, 0
    %331 = vmatprep.subr.mxu0 0.0
    %332 = vmatpush1.msra.mxu0 %v35
    %333 = vmatprep.subr.mxu0 0.0
    %334 = vmatpush1.msra.mxu0 %v36
    %335 = vmatprep.subr.mxu0 0.0
    %336 = vmatpush1.msra.mxu0 %v37
    %337 = vmatprep.subr.mxu0 0.0
    %338 = vmatpush1.msra.mxu0 %v38
    %339 = vmatprep.subr.mxu0 0.0
    %340 = vmatpush1.msra.mxu0 0.0
    %341 = vmatprep.subr.mxu0 0.0
    %342 = vmatpush1.msra.mxu0 0.0
    %343 = vmatprep.subr.mxu0 0.0
    %344 = vmatpush1.msra.mxu0 0.0
    %345 = vmatprep.subr.mxu0 0.0
    %346 = vmatpush1.msra.mxu0 0.0
    %347 = vmatprep.subr.mxu0 0.0
    %348 = vmatpush1.msra.mxu0 0.0
    %349 = vmatprep.subr.mxu0 0.0
    %350 = vmatpush1.msra.mxu0 0.0
    %351 = vmatprep.subr.mxu0 0.0
    %352 = vmatpush1.msra.mxu0 0.0
    %353 = vmatprep.subr.mxu0 0.0
    %354 = vmatpush1.msra.mxu0 0.0
    %355 = vmatprep.subr.mxu0 0.0
    %356 = vmatpush1.msra.mxu0 0.0
    %357 = vmatprep.subr.mxu0 0.0
    %358 = vmatpush1.msra.mxu0 0.0
    %359 = vmatprep.subr.mxu0 0.0
    %360 = vmatpush1.msra.mxu0 0.0
    %361 = vmatprep.subr.mxu0 0.0
    %362 = vmatpush1.msra.mxu0 0.0
    %363 = vmatprep.subr.mxu0 0.0
    %364 = vmatpush1.msra.mxu0 0.0
    %365 = vmatprep.subr.mxu0 0.0
    %366 = vmatpush1.msra.mxu0 0.0
    %367 = vmatprep.subr.mxu0 0.0
    %368 = vmatpush1.msra.mxu0 0.0
    %369 = vmatprep.subr.mxu0 0.0
    %370 = vmatpush1.msra.mxu0 0.0
    %371 = vmatprep.subr.mxu0 0.0
    %372 = vmatpush1.msra.mxu0 0.0
    %373 = vmatprep.subr.mxu0 0.0
    %374 = vmatpush1.msra.mxu0 0.0
    %375 = vmatprep.subr.mxu0 0.0
    %376 = vmatpush1.msra.mxu0 0.0
    %377 = vmatprep.subr.mxu0 0.0
    %378 = vmatpush1.msra.mxu0 0.0
    %379 = vmatprep.subr.mxu0 0.0
    %380 = vmatpush1.msra.mxu0 0.0
    %381 = vmatprep.subr.mxu0 0.0
    %382 = vmatpush1.msra.mxu0 0.0
    %383 = vmatprep.subr.mxu0 0.0
    %384 = vmatpush1.msra.mxu0 0.0
    %385 = vmatprep.subr.mxu0 0.0
    %386 = vmatpush1.msra.mxu0 0.0
    %387 = vmatprep.subr.mxu0 0.0
    %388 = vmatpush1.msra.mxu0 0.0
    %389 = vmatprep.subr.mxu0 0.0
    %390 = vmatpush1.msra.mxu0 0.0
    %391 = vmatprep.subr.mxu0 0.0
    %392 = vmatpush1.msra.mxu0 0.0
    %393 = vmatprep.subr.mxu0 0.0
    %394 = vmatpush1.msra.mxu0 0.0
    %395 = vmatprep.mubr.f32.mxu0 0.0
    %396 = vmatmul.mubr.f32.gmra.mrb[0].mxu0 %v329
    %v397 = vpop.f32.mrb[0].mxu0
    %v398 = vadd.f32 0.0, %v397
    %v399 = vpop.f32.mrb[0].mxu0
    %400 = vdwg.mxu0
    %v402 = vrot.slane %v398, 5
    %v403 = vrot.slane %v398, 6
    %v406 = vadd.f32 %v69, %v402
    %v407 = vadd.f32 %v70, %v403
    %v408 = vtanh.pop %v406
    %v409 = vtanh.pop %v407
    %v412 = vrot.slane %v408, 3
    %v413 = vrot.slane %v409, 2
    %v414 = vsel %vm157, %v413, %v412
    %v415 = vsel %vm72, %v414, 0
    %417 = vmatprep.subr.mxu0 0.0
    %418 = vmatpush1.msra.mxu0 %v35
    %419 = vmatprep.subr.mxu0 0.0
    %420 = vmatpush1.msra.mxu0 %v36
    %421 = vmatprep.subr.mxu0 0.0
    %422 = vmatpush1.msra.mxu0 %v37
    %423 = vmatprep.subr.mxu0 0.0
    %424 = vmatpush1.msra.mxu0 %v38
    %425 = vmatprep.subr.mxu0 0.0
    %426 = vmatpush1.msra.mxu0 0.0
    %427 = vmatprep.subr.mxu0 0.0
    %428 = vmatpush1.msra.mxu0 0.0
    %429 = vmatprep.subr.mxu0 0.0
    %430 = vmatpush1.msra.mxu0 0.0
    %431 = vmatprep.subr.mxu0 0.0
    %432 = vmatpush1.msra.mxu0 0.0
    %433 = vmatprep.subr.mxu0 0.0
    %434 = vmatpush1.msra.mxu0 0.0
    %435 = vmatprep.subr.mxu0 0.0
    %436 = vmatpush1.msra.mxu0 0.0
    %437 = vmatprep.subr.mxu0 0.0
    %438 = vmatpush1.msra.mxu0 0.0
    %439 = vmatprep.subr.mxu0 0.0
    %440 = vmatpush1.msra.mxu0 0.0
    %441 = vmatprep.subr.mxu0 0.0
    %442 = vmatpush1.msra.mxu0 0.0
    %443 = vmatprep.subr.mxu0 0.0
    %444 = vmatpush1.msra.mxu0 0.0
    %445 = vmatprep.subr.mxu0 0.0
    %446 = vmatpush1.msra.mxu0 0.0
    %447 = vmatprep.subr.mxu0 0.0
    %448 = vmatpush1.msra.mxu0 0.0
    %449 = vmatprep.subr.mxu0 0.0
    %450 = vmatpush1.msra.mxu0 0.0
    %451 = vmatprep.subr.mxu0 0.0
    %452 = vmatpush1.msra.mxu0 0.0
    %453 = vmatprep.subr.mxu0 0.0
    %454 = vmatpush1.msra.mxu0 0.0
    %455 = vmatprep.subr.mxu0 0.0
    %456 = vmatpush1.msra.mxu0 0.0
    %457 = vmatprep.subr.mxu0 0.0
    %458 = vmatpush1.msra.mxu0 0.0
    %459 = vmatprep.subr.mxu0 0.0
    %460 = vmatpush1.msra.mxu0 0.0
    %461 = vmatprep.subr.mxu0 0.0
    %462 = vmatpush1.msra.mxu0 0.0
    %463 = vmatprep.subr.mxu0 0.0
    %464 = vmatpush1.msra.mxu0 0.0
    %465 = vmatprep.subr.mxu0 0.0
    %466 = vmatpush1.msra.mxu0 0.0
    %467 = vmatprep.subr.mxu0 0.0
    %468 = vmatpush1.msra.mxu0 0.0
    %469 = vmatprep.subr.mxu0 0.0
    %470 = vmatpush1.msra.mxu0 0.0
    %471 = vmatprep.subr.mxu0 0.0
    %472 = vmatpush1.msra.mxu0 0.0
    %473 = vmatprep.subr.mxu0 0.0
    %474 = vmatpush1.msra.mxu0 0.0
    %475 = vmatprep.subr.mxu0 0.0
    %476 = vmatpush1.msra.mxu0 0.0
    %477 = vmatprep.subr.mxu0 0.0
    %478 = vmatpush1.msra.mxu0 0.0
    %479 = vmatprep.subr.mxu0 0.0
    %480 = vmatpush1.msra.mxu0 0.0
    %481 = vmatprep.mubr.f32.mxu0 0.0
    %482 = vmatmul.mubr.f32.gmra.mrb[0].mxu0 %v415
    %v483 = vpop.f32.mrb[0].mxu0
    %v484 = vadd.f32 0.0, %v483
    %v485 = vpop.f32.mrb[0].mxu0
    %486 = vdwg.mxu0
    %v488 = vrot.slane %v484, 4
    %v489 = vrot.slane %v484, 5
    %v492 = vadd.f32 %v69, %v488
    %v493 = vadd.f32 %v70, %v489
    %v494 = vtanh.pop %v492
    %v495 = vtanh.pop %v493
    %v498 = vrot.slane %v494, 4
    %v499 = vrot.slane %v495, 3
    %v500 = vsel %vm157, %v499, %v498
    %v501 = vsel %vm72, %v500, 0
    %503 = vmatprep.subr.mxu0 0.0
    %504 = vmatpush1.msra.mxu0 %v35
    %505 = vmatprep.subr.mxu0 0.0
    %506 = vmatpush1.msra.mxu0 %v36
    %507 = vmatprep.subr.mxu0 0.0
    %508 = vmatpush1.msra.mxu0 %v37
    %509 = vmatprep.subr.mxu0 0.0
    %510 = vmatpush1.msra.mxu0 %v38
    %511 = vmatprep.subr.mxu0 0.0
    %512 = vmatpush1.msra.mxu0 0.0
    %513 = vmatprep.subr.mxu0 0.0
    %514 = vmatpush1.msra.mxu0 0.0
    %515 = vmatprep.subr.mxu0 0.0
    %516 = vmatpush1.msra.mxu0 0.0
    %517 = vmatprep.subr.mxu0 0.0
    %518 = vmatpush1.msra.mxu0 0.0
    %519 = vmatprep.subr.mxu0 0.0
    %520 = vmatpush1.msra.mxu0 0.0
    %521 = vmatprep.subr.mxu0 0.0
    %522 = vmatpush1.msra.mxu0 0.0
    %523 = vmatprep.subr.mxu0 0.0
    %524 = vmatpush1.msra.mxu0 0.0
    %525 = vmatprep.subr.mxu0 0.0
    %526 = vmatpush1.msra.mxu0 0.0
    %527 = vmatprep.subr.mxu0 0.0
    %528 = vmatpush1.msra.mxu0 0.0
    %529 = vmatprep.subr.mxu0 0.0
    %530 = vmatpush1.msra.mxu0 0.0
    %531 = vmatprep.subr.mxu0 0.0
    %532 = vmatpush1.msra.mxu0 0.0
    %533 = vmatprep.subr.mxu0 0.0
    %534 = vmatpush1.msra.mxu0 0.0
    %535 = vmatprep.subr.mxu0 0.0
    %536 = vmatpush1.msra.mxu0 0.0
    %537 = vmatprep.subr.mxu0 0.0
    %538 = vmatpush1.msra.mxu0 0.0
    %539 = vmatprep.subr.mxu0 0.0
    %540 = vmatpush1.msra.mxu0 0.0
    %541 = vmatprep.subr.mxu0 0.0
    %542 = vmatpush1.msra.mxu0 0.0
    %543 = vmatprep.subr.mxu0 0.0
    %544 = vmatpush1.msra.mxu0 0.0
    %545 = vmatprep.subr.mxu0 0.0
    %546 = vmatpush1.msra.mxu0 0.0
    %547 = vmatprep.subr.mxu0 0.0
    %548 = vmatpush1.msra.mxu0 0.0
    %549 = vmatprep.subr.mxu0 0.0
    %550 = vmatpush1.msra.mxu0 0.0
    %551 = vmatprep.subr.mxu0 0.0
    %552 = vmatpush1.msra.mxu0 0.0
    %553 = vmatprep.subr.mxu0 0.0
    %554 = vmatpush1.msra.mxu0 0.0
    %555 = vmatprep.subr.mxu0 0.0
    %556 = vmatpush1.msra.mxu0 0.0
    %557 = vmatprep.subr.mxu0 0.0
    %558 = vmatpush1.msra.mxu0 0.0
    %559 = vmatprep.subr.mxu0 0.0
    %560 = vmatpush1.msra.mxu0 0.0
    %561 = vmatprep.subr.mxu0 0.0
    %562 = vmatpush1.msra.mxu0 0.0
    %563 = vmatprep.subr.mxu0 0.0
    %564 = vmatpush1.msra.mxu0 0.0
    %565 = vmatprep.subr.mxu0 0.0
    %566 = vmatpush1.msra.mxu0 0.0
    %567 = vmatprep.mubr.f32.mxu0 0.0
    %568 = vmatmul.mubr.f32.gmra.mrb[0].mxu0 %v501
    %v569 = vpop.f32.mrb[0].mxu0
    %v570 = vadd.f32 0.0, %v569
    %v571 = vpop.f32.mrb[0].mxu0
    %572 = vdwg.mxu0
    %v574 = vrot.slane %v570, 3
    %v575 = vrot.slane %v570, 4
    %v578 = vadd.f32 %v69, %v574
    %v579 = vadd.f32 %v70, %v575
    %v580 = vtanh.pop %v578
    %v581 = vtanh.pop %v579
    %v584 = vrot.slane %v580, 5
    %v585 = vrot.slane %v581, 4
    %v586 = vsel %vm157, %v585, %v584
    %v587 = vsel %vm72, %v586, 0
    %589 = vmatprep.subr.mxu0 0.0
    %590 = vmatpush1.msra.mxu0 %v35
    %591 = vmatprep.subr.mxu0 0.0
    %592 = vmatpush1.msra.mxu0 %v36
    %593 = vmatprep.subr.mxu0 0.0
    %594 = vmatpush1.msra.mxu0 %v37
    %595 = vmatprep.subr.mxu0 0.0
    %596 = vmatpush1.msra.mxu0 %v38
    %597 = vmatprep.subr.mxu0 0.0
    %598 = vmatpush1.msra.mxu0 0.0
    %599 = vmatprep.subr.mxu0 0.0
    %600 = vmatpush1.msra.mxu0 0.0
    %601 = vmatprep.subr.mxu0 0.0
    %602 = vmatpush1.msra.mxu0 0.0
    %603 = vmatprep.subr.mxu0 0.0
    %604 = vmatpush1.msra.mxu0 0.0
    %605 = vmatprep.subr.mxu0 0.0
    %606 = vmatpush1.msra.mxu0 0.0
    %607 = vmatprep.subr.mxu0 0.0
    %608 = vmatpush1.msra.mxu0 0.0
    %609 = vmatprep.subr.mxu0 0.0
    %610 = vmatpush1.msra.mxu0 0.0
    %611 = vmatprep.subr.mxu0 0.0
    %612 = vmatpush1.msra.mxu0 0.0
    %613 = vmatprep.subr.mxu0 0.0
    %614 = vmatpush1.msra.mxu0 0.0
    %615 = vmatprep.subr.mxu0 0.0
    %616 = vmatpush1.msra.mxu0 0.0
    %617 = vmatprep.subr.mxu0 0.0
    %618 = vmatpush1.msra.mxu0 0.0
    %619 = vmatprep.subr.mxu0 0.0
    %620 = vmatpush1.msra.mxu0 0.0
    %621 = vmatprep.subr.mxu0 0.0
    %622 = vmatpush1.msra.mxu0 0.0
    %623 = vmatprep.subr.mxu0 0.0
    %624 = vmatpush1.msra.mxu0 0.0
    %625 = vmatprep.subr.mxu0 0.0
    %626 = vmatpush1.msra.mxu0 0.0
    %627 = vmatprep.subr.mxu0 0.0
    %628 = vmatpush1.msra.mxu0 0.0
    %629 = vmatprep.subr.mxu0 0.0
    %630 = vmatpush1.msra.mxu0 0.0
    %631 = vmatprep.subr.mxu0 0.0
    %632 = vmatpush1.msra.mxu0 0.0
    %633 = vmatprep.subr.mxu0 0.0
    %634 = vmatpush1.msra.mxu0 0.0
    %635 = vmatprep.subr.mxu0 0.0
    %636 = vmatpush1.msra.mxu0 0.0
    %637 = vmatprep.subr.mxu0 0.0
    %638 = vmatpush1.msra.mxu0 0.0
    %639 = vmatprep.subr.mxu0 0.0
    %640 = vmatpush1.msra.mxu0 0.0
    %641 = vmatprep.subr.mxu0 0.0
    %642 = vmatpush1.msra.mxu0 0.0
    %643 = vmatprep.subr.mxu0 0.0
    %644 = vmatpush1.msra.mxu0 0.0
    %645 = vmatprep.subr.mxu0 0.0
    %646 = vmatpush1.msra.mxu0 0.0
    %647 = vmatprep.subr.mxu0 0.0
    %648 = vmatpush1.msra.mxu0 0.0
    %649 = vmatprep.subr.mxu0 0.0
    %650 = vmatpush1.msra.mxu0 0.0
    %651 = vmatprep.subr.mxu0 0.0
    %652 = vmatpush1.msra.mxu0 0.0
    %653 = vmatprep.mubr.f32.mxu0 0.0
    %654 = vmatmul.mubr.f32.gmra.mrb[0].mxu0 %v587
    %v655 = vpop.f32.mrb[0].mxu0
    %v656 = vadd.f32 0.0, %v655
    %v657 = vpop.f32.mrb[0].mxu0
    %658 = vdwg.mxu0
    %v660 = vrot.slane %v656, 2
    %v661 = vrot.slane %v656, 3
    %v664 = vadd.f32 %v69, %v660
    %v665 = vadd.f32 %v70, %v661
    %v666 = vtanh.pop %v664
    %v667 = vtanh.pop %v665
    %v670 = vrot.slane %v666, 6
    %v671 = vrot.slane %v667, 5
    %v672 = vsel %vm157, %v671, %v670
    %v673 = vsel %vm72, %v672, 0
    %675 = vmatprep.subr.mxu0 0.0
    %676 = vmatpush1.msra.mxu0 %v35
    %677 = vmatprep.subr.mxu0 0.0
    %678 = vmatpush1.msra.mxu0 %v36
    %679 = vmatprep.subr.mxu0 0.0
    %680 = vmatpush1.msra.mxu0 %v37
    %681 = vmatprep.subr.mxu0 0.0
    %682 = vmatpush1.msra.mxu0 %v38
    %683 = vmatprep.subr.mxu0 0.0
    %684 = vmatpush1.msra.mxu0 0.0
    %685 = vmatprep.subr.mxu0 0.0
    %686 = vmatpush1.msra.mxu0 0.0
    %687 = vmatprep.subr.mxu0 0.0
    %688 = vmatpush1.msra.mxu0 0.0
    %689 = vmatprep.subr.mxu0 0.0
    %690 = vmatpush1.msra.mxu0 0.0
    %691 = vmatprep.subr.mxu0 0.0
    %692 = vmatpush1.msra.mxu0 0.0
    %693 = vmatprep.subr.mxu0 0.0
    %694 = vmatpush1.msra.mxu0 0.0
    %695 = vmatprep.subr.mxu0 0.0
    %696 = vmatpush1.msra.mxu0 0.0
    %697 = vmatprep.subr.mxu0 0.0
    %698 = vmatpush1.msra.mxu0 0.0
    %699 = vmatprep.subr.mxu0 0.0
    %700 = vmatpush1.msra.mxu0 0.0
    %701 = vmatprep.subr.mxu0 0.0
    %702 = vmatpush1.msra.mxu0 0.0
    %703 = vmatprep.subr.mxu0 0.0
    %704 = vmatpush1.msra.mxu0 0.0
    %705 = vmatprep.subr.mxu0 0.0
    %706 = vmatpush1.msra.mxu0 0.0
    %707 = vmatprep.subr.mxu0 0.0
    %708 = vmatpush1.msra.mxu0 0.0
    %709 = vmatprep.subr.mxu0 0.0
    %710 = vmatpush1.msra.mxu0 0.0
    %711 = vmatprep.subr.mxu0 0.0
    %712 = vmatpush1.msra.mxu0 0.0
    %713 = vmatprep.subr.mxu0 0.0
    %714 = vmatpush1.msra.mxu0 0.0
    %715 = vmatprep.subr.mxu0 0.0
    %716 = vmatpush1.msra.mxu0 0.0
    %717 = vmatprep.subr.mxu0 0.0
    %718 = vmatpush1.msra.mxu0 0.0
    %719 = vmatprep.subr.mxu0 0.0
    %720 = vmatpush1.msra.mxu0 0.0
    %721 = vmatprep.subr.mxu0 0.0
    %722 = vmatpush1.msra.mxu0 0.0
    %723 = vmatprep.subr.mxu0 0.0
    %724 = vmatpush1.msra.mxu0 0.0
    %725 = vmatprep.subr.mxu0 0.0
    %726 = vmatpush1.msra.mxu0 0.0
    %727 = vmatprep.subr.mxu0 0.0
    %728 = vmatpush1.msra.mxu0 0.0
    %729 = vmatprep.subr.mxu0 0.0
    %730 = vmatpush1.msra.mxu0 0.0
    %731 = vmatprep.subr.mxu0 0.0
    %732 = vmatpush1.msra.mxu0 0.0
    %733 = vmatprep.subr.mxu0 0.0
    %734 = vmatpush1.msra.mxu0 0.0
    %735 = vmatprep.subr.mxu0 0.0
    %736 = vmatpush1.msra.mxu0 0.0
    %737 = vmatprep.subr.mxu0 0.0
    %738 = vmatpush1.msra.mxu0 0.0
    %739 = vmatprep.mubr.f32.mxu0 0.0
    %740 = vmatmul.mubr.f32.gmra.mrb[0].mxu0 %v673
    %v741 = vpop.f32.mrb[0].mxu0
    %v742 = vadd.f32 0.0, %v741
    %v743 = vpop.f32.mrb[0].mxu0
    %744 = vdwg.mxu0
    %v746 = vrot.slane %v742, 1
    %v747 = vrot.slane %v742, 2
    %v750 = vadd.f32 %v69, %v746
    %v751 = vadd.f32 %v70, %v747
    %v752 = vtanh.pop %v750
    %v753 = vtanh.pop %v751
    %vm754 = vcmask 1040384
    %v755 = vsel %vm754, %v152, %v237
    %v756 = vsel %vm754, %v153, %v238
    %vm757 = vcmask 1041408
    %v758 = vsel %vm757, %v755, %v322
    %v759 = vsel %vm757, %v756, %v323
    %vm760 = vcmask 1042432
    %v761 = vsel %vm760, %v758, %v408
    %v762 = vsel %vm760, %v759, %v409
    %vm763 = vcmask 1043456
    %v764 = vsel %vm763, %v761, %v494
    %v765 = vsel %vm763, %v762, %v495
    %vm766 = vcmask 1044480
    %v767 = vsel %vm766, %v764, %v580
    %v768 = vsel %vm766, %v765, %v581
    %vm769 = vcmask 1045504
    %v770 = vsel %vm769, %v767, %v666
    %v771 = vsel %vm769, %v768, %v667
    %vm772 = vcmask 1046528
    %v773 = vsel %vm772, %v770, %v752
    %v774 = vsel %vm772, %v771, %v753
    %v776 = vlaneseq
    %v777 = vshrl.u32 %v776, 7
    %v778 = vsub.s32 0, %v777
    %v779 = vrot.slane %v39, %v778
    %v781 = vmul.f32 %v773, %v779
    %v782 = vmul.f32 %v774, %v779
    %v783 = vsel %vm72, %v781, 0.0
    %784 = vadd.xlane.f32.xlu0 %v783
    %v785 = vpop.xlane.xlu0 %784
    %v786 = vsel %vm72, %v782, 0.0
    %787 = vadd.xlane.f32.xlu0 %v786
    %v788 = vpop.xlane.xlu0 %787
    %v790 = vlaneseq
    %v791 = vshrl.u32 %v790, 7
    %v792 = vsub.s32 0, %v791
    %v793 = vrot.slane %v40, %v792
    %794 = vset.pattern.permute.xlu0 0
    %795 = vperm.xlu0 %794, %v793
    %v796 = vpop.permute.xlu0 %795
    %v798 = vadd.f32 %v785, %v796
    %v799 = vadd.f32 %v788, %v796
    %v802 = vlaneseq
    %v803 = vand.u32 %v802, 127
    %v804 = vlaneseq
    %v805 = vshrl.u32 %v804, 7
    %v806 = vsub.s32 %v803, %v805
    %v807 = vrot.slane %v798, %v806
    %v808 = vlaneseq
    %v809 = vshrl.u32 %v808, 7
    %v810 = vsub.s32 %v803, %v809
    %v811 = vrot.slane %v799, %v810
    %v812 = vsel %vm157, %v811, %v807
    %vm814 = vcmask 58368
    %815 = vst.msk [vmem:[#allocation3] sm:$0x3] %vm814, %v812
    %v818 = vrot.slane %v753, 7
    %vm821 = vcmask 261127
    %822 = vst.msk [vmem:[#allocation5 - $0x7] sm:$0x80] %vm821, %v752
    %vm823 = vcmask 253952
    %824 = vst.msk [vmem:[#allocation5 + $0x1] sm:$0x1] %vm823, %v818
    // Predicated region
    $region30: #{my_rnn_forward.1} parent=1 // pred_check
      _
    $region31: #{my_rnn_forward.1} parent=1 // pred_check_branch
      %826 = sbr.rel (0) target = $region33
    $region32: #{my_rnn_forward.1} parent=1 // pred_region
      %s828 = ssub.s32 32, 32
      %829 = vsyncadd [#allocation4], %s828
      %s831 = sshll.u32 [#allocation3], 4
      %s832 = int_to_ptr.vmem [resolvable:$true] %s831
      %834 = dma.vmem_to_hbm [thread:$0]  %s832, 32, %s7, [#allocation4]
    $region33: #{my_rnn_forward.1} parent=1 // pred_fallthru
      _
    // Predicated region
    $region34: #{my_rnn_forward.1} parent=1 // pred_check
      _
    $region35: #{my_rnn_forward.1} parent=1 // pred_check_branch
      %836 = sbr.rel (0) target = $region37
    $region36: #{my_rnn_forward.1} parent=1 // pred_region
      %s838 = ssub.s32 32, 32
      %839 = vsyncadd [#allocation6], %s838
      %s841 = sshll.u32 [#allocation5], 4
      %s842 = int_to_ptr.vmem [resolvable:$true] %s841
      %844 = dma.vmem_to_hbm [thread:$0]  %s842, 32, %s8, [#allocation6]
    $region37: #{my_rnn_forward.1} parent=1 // pred_fallthru
      _
    // Predicated region
    $region38: #{my_rnn_forward.1} parent=1 // pred_check
      _
    $region39: #{my_rnn_forward.1} parent=1 // pred_check_branch
      %846 = sbr.rel (0) target = $region41
    $region40: #{my_rnn_forward.1} parent=1 // pred_region
      %847 = dma.done [#allocation4], 32
    $region41: #{my_rnn_forward.1} parent=1 // pred_fallthru
      _
    // Predicated region
    $region42: #{my_rnn_forward.1} parent=1 // pred_check
      _
    $region43: #{my_rnn_forward.1} parent=1 // pred_check_branch
      %849 = sbr.rel (0) target = $region45
    $region44: #{my_rnn_forward.1} parent=1 // pred_region
      %850 = dma.done [#allocation6], 32
    $region45: #{my_rnn_forward.1} parent=1 // pred_fallthru
      _
    %851 = vsyncpa [#allocation4], 1
    %852 = vsyncpa [#allocation6], 1

</llo_original>
